<compile_context>
chip_gen: v5e
topology: v5e:2x2
jax: 0.10.0
libtpu: 0.0.40
codegen_flags: <defaults>
</compile_context>

<pallas_src>
import functools
import math

import jax
import jax.numpy as jnp
from jax import lax
from jax.experimental import pallas as pl
from jax.experimental.pallas import tpu as pltpu


_TILE_TARGET_BYTES = 2 * 1024 * 1024   # per buffered tile; x2 (double buffer) x2 (in+out)


def _pick_tile_rows(total_rows, row_bytes, target_bytes=_TILE_TARGET_BYTES):
    """Largest row tile (multiple of 8, or the full extent) within the byte budget."""
    max_rows = max(1, target_bytes // max(1, row_bytes))
    if total_rows <= max_rows:
        return total_rows
    return max(8, (max_rows // 8) * 8)


# ----------------------------------------------------------------------------
# Stage 1: per-feature gate = sigmoid(W2 @ relu(W1 @ mean(x) + b1) + b2)
# ----------------------------------------------------------------------------
def _gate_kernel(x_ref, w1_ref, b1_ref, w2_ref, b2_ref, gate_ref, acc_ref,
                 *, n_rows, tile_rows, ragged):
    i = pl.program_id(0)

    @pl.when(i == 0)
    def _init():
        acc_ref[...] = jnp.zeros_like(acc_ref)

    x = x_ref[...]
    if ragged:
        # Last block overhangs the array; mask the out-of-bounds rows to zero.
        row = i * tile_rows + lax.broadcasted_iota(jnp.int32, x.shape, 0)
        x = jnp.where(row < n_rows, x.astype(jnp.float32), 0.0)
    else:
        x = x.astype(jnp.float32)          # no-op for f32 inputs
    acc_ref[...] += jnp.sum(x, axis=0, keepdims=True)

    @pl.when(i == pl.num_programs(0) - 1)
    def _finalize():
        mean = acc_ref[...] * (1.0 / n_rows)
        h = jnp.dot(mean, w1_ref[...], preferred_element_type=jnp.float32) + b1_ref[...]
        h = jnp.maximum(h, 0.0)
        z = jnp.dot(h, w2_ref[...], preferred_element_type=jnp.float32) + b2_ref[...]
        gate_ref[...] = jax.nn.sigmoid(z)


# ----------------------------------------------------------------------------
# Stage 2: out = gate * x   (lane-dense, row-tiled, pipelined streaming pass)
# ----------------------------------------------------------------------------
def _scale_kernel(gate_ref, x_ref, o_ref):
    gate = gate_ref[...].astype(x_ref.dtype)       # (1, W), resident in VMEM
    o_ref[...] = (x_ref[...] * gate).astype(o_ref.dtype)


def attention1_nei(x, w1, b1, w2, b2):
    """x: (N, D); w1: (D, H) pre-transposed; b1: (H,); w2: (H, D); b2: (D,)."""
    n, d = x.shape
    h = w1.shape[1]
    b1_2d = b1.reshape(1, h)
    b2_2d = b2.reshape(1, d)
    itemsize = jnp.dtype(x.dtype).itemsize

    # ---------------- stage 1: gate ------------------------------------------
    d_padded = ((d + 127) // 128) * 128            # VMEM lane padding of a (.., d) tile
    tile_n = _pick_tile_rows(n, d_padded * 4)
    grid_n = pl.cdiv(n, tile_n)
    ragged = (n % tile_n) != 0

    gate = pl.pallas_call(
        functools.partial(_gate_kernel, n_rows=n, tile_rows=tile_n, ragged=ragged),
        out_shape=jax.ShapeDtypeStruct((1, d), jnp.float32),
        grid_spec=pltpu.PrefetchScalarGridSpec(
            num_scalar_prefetch=0,
            grid=(grid_n,),
            in_specs=[
                pl.BlockSpec((tile_n, d), lambda i: (i, 0)),
                pl.BlockSpec((d, h), lambda i: (0, 0)),
                pl.BlockSpec((1, h), lambda i: (0, 0)),
                pl.BlockSpec((h, d), lambda i: (0, 0)),
                pl.BlockSpec((1, d), lambda i: (0, 0)),
            ],
            out_specs=pl.BlockSpec((1, d), lambda i: (0, 0)),
            scratch_shapes=[pltpu.VMEM((1, d), jnp.float32)],
        ),
        compiler_params=pltpu.CompilerParams(
            dimension_semantics=("arbitrary",)),            # reduction axis
        cost_estimate=pl.CostEstimate(
            flops=n * d + 4 * d * h,
            transcendentals=d,
            bytes_accessed=n * d * itemsize + (2 * d * h + h + 2 * d) * 4),
    )(x, w1, b1_2d, w2, b2_2d)

    # ---------------- stage 2: scale ------------------------------------------
    # Fuse `group` consecutive rows so the last (lane) dim is a multiple of 128.
    if d % 128 == 0:
        group = 1
    else:
        group = 128 // math.gcd(d, 128)
        if n % group != 0 or n < group:
            group = 1                               # fall back to natural layout
    rows = n // group
    width = d * group

    x_flat = x.reshape(rows, width)                 # contiguous reshape (free)
    gate_flat = jnp.tile(gate, (1, group)) if group > 1 else gate

    tile_r = _pick_tile_rows(rows, width * itemsize)
    grid_r = pl.cdiv(rows, tile_r)

    out_flat = pl.pallas_call(
        _scale_kernel,
        out_shape=jax.ShapeDtypeStruct((rows, width), x.dtype),
        grid_spec=pltpu.PrefetchScalarGridSpec(
            num_scalar_prefetch=0,
            grid=(grid_r,),
            in_specs=[
                pl.BlockSpec((1, width), lambda i: (0, 0)),       # gate: fetched once
                pl.BlockSpec((tile_r, width), lambda i: (i, 0)),  # x tile stream
            ],
            out_specs=pl.BlockSpec((tile_r, width), lambda i: (i, 0)),
        ),
        compiler_params=pltpu.CompilerParams(
            dimension_semantics=("parallel",)),      # megacore-shard row tiles (v7x)
        cost_estimate=pl.CostEstimate(
            flops=n * d,
            transcendentals=0,
            bytes_accessed=2 * n * d * itemsize + width * 4),
    )(gate_flat, x_flat)

    return out_flat.reshape(n, d)


def _reference(x, w1, b1, w2, b2):
    mean = jnp.mean(x.astype(jnp.float32), axis=0, keepdims=True)
    hid = jnp.maximum(mean @ w1 + b1, 0.0)
    gate = jax.nn.sigmoid(hid @ w2 + b2)
    return (gate * x.astype(jnp.float32)).astype(x.dtype)


if __name__ == "__main__":
    N, D, SQUEEZE = 64, 32, 4
    H = D // SQUEEZE

    key = jax.random.PRNGKey(0)
    kx, kw1, kb1, kw2, kb2 = jax.random.split(key, 5)

    x = jax.random.normal(kx, (N, D), dtype=jnp.float32)

    # Deterministic nn.Linear-style init: U(-1/sqrt(fan_in), 1/sqrt(fan_in)),
    # stored pre-transposed as (in, out) so the kernel does y = x @ W.
    lim1 = 1.0 / (D ** 0.5)
    lim2 = 1.0 / (H ** 0.5)
    w1 = jax.random.uniform(kw1, (D, H), jnp.float32, -lim1, lim1)
    b1 = jax.random.uniform(kb1, (H,), jnp.float32, -lim1, lim1)
    w2 = jax.random.uniform(kw2, (H, D), jnp.float32, -lim2, lim2)
    b2 = jax.random.uniform(kb2, (D,), jnp.float32, -lim2, lim2)

    fwd = jax.jit(attention1_nei)

    # Small-shape check (matches the module's typical node/feature sizes).
    out = jax.block_until_ready(fwd(x, w1, b1, w2, b2))
    ref = _reference(x, w1, b1, w2, b2)
    assert out.shape == (N, D)
    assert jnp.allclose(out, ref, atol=1e-5, rtol=1e-5), "mismatch vs reference (small)"

    # Larger shape: exercises the multi-step reduction accumulator in stage 1 and
    # the pipelined, parallel, lane-dense scale pass (uneven last row tile) in stage 2.
    N2 = 20480
    x2 = jax.random.normal(jax.random.PRNGKey(1), (N2, D), dtype=jnp.float32)
    out2 = jax.block_until_ready(fwd(x2, w1, b1, w2, b2))
    ref2 = _reference(x2, w1, b1, w2, b2)
    assert out2.shape == (N2, D)
    assert jnp.allclose(out2, ref2, atol=1e-4, rtol=1e-4), "mismatch vs reference (large)"

    print("KERNEL_OK")
</pallas_src>

<mosaic_0001>
module attributes {stable_mosaic.version = 11 : i64} {
  func.func @_scale_kernel(%arg0: i32, %arg1: memref<1x128xf32, #tpu.memory_space<vmem>>, %arg2: memref<16x128xf32, #tpu.memory_space<vmem>>, %arg3: memref<16x128xf32, #tpu.memory_space<vmem>>) attributes {dimension_semantics = [#tpu.dimension_semantics<parallel>], iteration_bounds = array<i64: 1>, scalar_prefetch = 0 : i64, scratch_operands = 0 : i64, tpu.core_type = #tpu.core_type<tc>, window_params = [{pipeline_mode = #tpu.pipeline_mode<synchronous>, transform_indices = @transform_0, window_bounds = array<i64: 1, 128>}, {transform_indices = @transform_1, window_bounds = array<i64: 16, 128>}, {transform_indices = @transform_2, window_bounds = array<i64: 16, 128>}]} {
    %c0 = arith.constant 0 : index
    %c0_0 = arith.constant 0 : index
    %0 = vector.load %arg1[%c0, %c0_0] : memref<1x128xf32, #tpu.memory_space<vmem>>, vector<1x128xf32>
    %c0_1 = arith.constant 0 : index
    %c0_2 = arith.constant 0 : index
    %1 = vector.load %arg2[%c0_1, %c0_2] : memref<16x128xf32, #tpu.memory_space<vmem>>, vector<16x128xf32>
    %2 = vector.broadcast %0 : vector<1x128xf32> to vector<16x128xf32>
    %3 = arith.mulf %1, %2 : vector<16x128xf32>
    %c0_3 = arith.constant 0 : index
    %c0_4 = arith.constant 0 : index
    %4 = vector.load %arg3[%c0_3, %c0_4] : memref<16x128xf32, #tpu.memory_space<vmem>>, vector<16x128xf32>
    tpu.vector_store %arg3[%c0_3, %c0_4], %3 {strides = array<i32>} : memref<16x128xf32, #tpu.memory_space<vmem>>, vector<16x128xf32>,
    return
  }
  func.func @transform_0(%arg0: i32) -> (i32, i32) {
    %c0_i32 = arith.constant 0 : i32
    %c0_i32_0 = arith.constant 0 : i32
    %c0_i32_1 = arith.constant 0 : i32
    return %c0_i32, %c0_i32_0 : i32, i32
  }
  func.func @transform_1(%arg0: i32) -> (i32, i32) {
    %c0_i32 = arith.constant 0 : i32
    %c0_i32_0 = arith.constant 0 : i32
    return %arg0, %c0_i32 : i32, i32
  }
  func.func @transform_2(%arg0: i32) -> (i32, i32) {
    %c0_i32 = arith.constant 0 : i32
    %c0_i32_0 = arith.constant 0 : i32
    return %arg0, %c0_i32 : i32, i32
  }
}

module attributes {stable_mosaic.version = 11 : i64} {
  func.func @_gate_kernel(%arg0: i32, %arg1: memref<64x32xf32, #tpu.memory_space<vmem>>, %arg2: memref<32x8xf32, #tpu.memory_space<vmem>>, %arg3: memref<1x8xf32, #tpu.memory_space<vmem>>, %arg4: memref<8x32xf32, #tpu.memory_space<vmem>>, %arg5: memref<1x32xf32, #tpu.memory_space<vmem>>, %arg6: memref<1x32xf32, #tpu.memory_space<vmem>>, %arg7: memref<1x32xf32, #tpu.memory_space<vmem>>) attributes {dimension_semantics = [#tpu.dimension_semantics<arbitrary>], iteration_bounds = array<i64: 1>, scalar_prefetch = 0 : i64, scratch_operands = 1 : i64, tpu.core_type = #tpu.core_type<tc>, window_params = [{transform_indices = @transform_0, window_bounds = array<i64: 64, 32>}, {pipeline_mode = #tpu.pipeline_mode<synchronous>, transform_indices = @transform_1, window_bounds = array<i64: 32, 8>}, {pipeline_mode = #tpu.pipeline_mode<synchronous>, transform_indices = @transform_2, window_bounds = array<i64: 1, 8>}, {pipeline_mode = #tpu.pipeline_mode<synchronous>, transform_indices = @transform_3, window_bounds = array<i64: 8, 32>}, {pipeline_mode = #tpu.pipeline_mode<synchronous>, transform_indices = @transform_4, window_bounds = array<i64: 1, 32>}, {pipeline_mode = #tpu.pipeline_mode<synchronous>, transform_indices = @transform_5, window_bounds = array<i64: 1, 32>}]} {
    %c0_i32 = arith.constant 0 : i32
    %0 = arith.cmpi eq, %arg0, %c0_i32 : i32
    %1 = arith.extui %0 : i1 to i32
    %c0_i32_0 = arith.constant 0 : i32
    %2 = arith.cmpi ne, %1, %c0_i32_0 : i32
    scf.if %2 {
      %cst_8 = arith.constant 0.000000e+00 : f32
      %12 = vector.broadcast %cst_8 : f32 to vector<1x32xf32>
      %c0_9 = arith.constant 0 : index
      %c0_10 = arith.constant 0 : index
      %13 = vector.load %arg7[%c0_9, %c0_10] : memref<1x32xf32, #tpu.memory_space<vmem>>, vector<1x32xf32>
      tpu.vector_store %arg7[%c0_9, %c0_10], %12 {strides = array<i32>} : memref<1x32xf32, #tpu.memory_space<vmem>>, vector<1x32xf32>,
    } else {
    }
    %c0 = arith.constant 0 : index
    %c0_1 = arith.constant 0 : index
    %3 = vector.load %arg1[%c0, %c0_1] : memref<64x32xf32, #tpu.memory_space<vmem>>, vector<64x32xf32>
    %c0_2 = arith.constant 0 : index
    %c0_3 = arith.constant 0 : index
    %4 = vector.load %arg7[%c0_2, %c0_3] : memref<1x32xf32, #tpu.memory_space<vmem>>, vector<1x32xf32>
    %cst = arith.constant dense<0.000000e+00> : vector<32xf32>
    %5 = vector.multi_reduction <add>, %3, %cst [0] : vector<64x32xf32> to vector<32xf32>
    %6 = vector.shape_cast %5 : vector<32xf32> to vector<1x32xf32>
    %7 = arith.addf %4, %6 : vector<1x32xf32>
    %c0_4 = arith.constant 0 : index
    %c0_5 = arith.constant 0 : index
    %8 = vector.load %arg7[%c0_4, %c0_5] : memref<1x32xf32, #tpu.memory_space<vmem>>, vector<1x32xf32>
    tpu.vector_store %arg7[%c0_4, %c0_5], %7 {strides = array<i32>} : memref<1x32xf32, #tpu.memory_space<vmem>>, vector<1x32xf32>,
    %c0_i32_6 = arith.constant 0 : i32
    %9 = arith.cmpi eq, %arg0, %c0_i32_6 : i32
    %10 = arith.extui %9 : i1 to i32
    %c0_i32_7 = arith.constant 0 : i32
    %11 = arith.cmpi ne, %10, %c0_i32_7 : i32
    scf.if %11 {
      %c0_8 = arith.constant 0 : index
      %c0_9 = arith.constant 0 : index
      %12 = vector.load %arg7[%c0_8, %c0_9] : memref<1x32xf32, #tpu.memory_space<vmem>>, vector<1x32xf32>
      %cst_10 = arith.constant 1.562500e-02 : f32
      %13 = vector.broadcast %cst_10 : f32 to vector<1x32xf32>
      %14 = arith.mulf %12, %13 : vector<1x32xf32>
      %c0_11 = arith.constant 0 : index
      %c0_12 = arith.constant 0 : index
      %15 = vector.load %arg2[%c0_11, %c0_12] : memref<32x8xf32, #tpu.memory_space<vmem>>, vector<32x8xf32>
      %cst_13 = arith.constant dense<0.000000e+00> : vector<1x8xf32>
      %16 = tpu.matmul %14, %15, %cst_13 {dimension_numbers = #tpu.dot_dimension_numbers<[1], [0], [0], [1], [0, 0, 1, 1], [], []>} : vector<1x32xf32>, vector<32x8xf32>, vector<1x8xf32> -> vector<1x8xf32>
      %c0_14 = arith.constant 0 : index
      %c0_15 = arith.constant 0 : index
      %17 = vector.load %arg3[%c0_14, %c0_15] : memref<1x8xf32, #tpu.memory_space<vmem>>, vector<1x8xf32>
      %18 = arith.addf %16, %17 : vector<1x8xf32>
      %cst_16 = arith.constant 0.000000e+00 : f32
      %19 = vector.broadcast %cst_16 : f32 to vector<1x8xf32>
      %20 = arith.maximumf %18, %19 : vector<1x8xf32>
      %c0_17 = arith.constant 0 : index
      %c0_18 = arith.constant 0 : index
      %21 = vector.load %arg4[%c0_17, %c0_18] : memref<8x32xf32, #tpu.memory_space<vmem>>, vector<8x32xf32>
      %cst_19 = arith.constant dense<0.000000e+00> : vector<1x32xf32>
      %22 = tpu.matmul %20, %21, %cst_19 {dimension_numbers = #tpu.dot_dimension_numbers<[1], [0], [0], [1], [0, 0, 1, 1], [], []>} : vector<1x8xf32>, vector<8x32xf32>, vector<1x32xf32> -> vector<1x32xf32>
      %c0_20 = arith.constant 0 : index
      %c0_21 = arith.constant 0 : index
      %23 = vector.load %arg5[%c0_20, %c0_21] : memref<1x32xf32, #tpu.memory_space<vmem>>, vector<1x32xf32>
      %24 = arith.addf %22, %23 : vector<1x32xf32>
      %25 = arith.negf %24 : vector<1x32xf32>
      %26 = math.exp %25 : vector<1x32xf32>
      %cst_22 = arith.constant 1.000000e+00 : f32
      %27 = vector.broadcast %cst_22 : f32 to vector<1x32xf32>
      %28 = arith.addf %27, %26 : vector<1x32xf32>
      %29 = arith.divf %27, %28 : vector<1x32xf32>
      %c0_23 = arith.constant 0 : index
      %c0_24 = arith.constant 0 : index
      %30 = vector.load %arg6[%c0_23, %c0_24] : memref<1x32xf32, #tpu.memory_space<vmem>>, vector<1x32xf32>
      tpu.vector_store %arg6[%c0_23, %c0_24], %29 {strides = array<i32>} : memref<1x32xf32, #tpu.memory_space<vmem>>, vector<1x32xf32>,
    } else {
    }
    return
  }
  func.func @transform_0(%arg0: i32) -> (i32, i32) {
    %c0_i32 = arith.constant 0 : i32
    %c0_i32_0 = arith.constant 0 : i32
    return %arg0, %c0_i32 : i32, i32
  }
  func.func @transform_1(%arg0: i32) -> (i32, i32) {
    %c0_i32 = arith.constant 0 : i32
    %c0_i32_0 = arith.constant 0 : i32
    %c0_i32_1 = arith.constant 0 : i32
    return %c0_i32, %c0_i32_0 : i32, i32
  }
  func.func @transform_2(%arg0: i32) -> (i32, i32) {
    %c0_i32 = arith.constant 0 : i32
    %c0_i32_0 = arith.constant 0 : i32
    %c0_i32_1 = arith.constant 0 : i32
    return %c0_i32, %c0_i32_0 : i32, i32
  }
  func.func @transform_3(%arg0: i32) -> (i32, i32) {
    %c0_i32 = arith.constant 0 : i32
    %c0_i32_0 = arith.constant 0 : i32
    %c0_i32_1 = arith.constant 0 : i32
    return %c0_i32, %c0_i32_0 : i32, i32
  }
  func.func @transform_4(%arg0: i32) -> (i32, i32) {
    %c0_i32 = arith.constant 0 : i32
    %c0_i32_0 = arith.constant 0 : i32
    %c0_i32_1 = arith.constant 0 : i32
    return %c0_i32, %c0_i32_0 : i32, i32
  }
  func.func @transform_5(%arg0: i32) -> (i32, i32) {
    %c0_i32 = arith.constant 0 : i32
    %c0_i32_0 = arith.constant 0 : i32
    %c0_i32_1 = arith.constant 0 : i32
    return %c0_i32, %c0_i32_0 : i32, i32
  }
}

</mosaic_0001>

<llo_original>
// kernel: attention1_nei.3
$region0: #{attention1_nei.3}
  #allocation0 [shape = 'u32[]', space=smem, size = 0x4, offset = 0x4, fixed_abs, tag = 'smem constant byte address 0x4 - core index']
  #allocation1 [shape = 'u32[72,128]{1,0:T(1,128)}', space=vmem, size = 0x9000, scoped, tag = 'internal scratch']
  %s0 = inlined_call_operand.vmem [shape: f32[1,128], index: 0, kind: input, shape index: {}]
  %s1 = inlined_call_operand.vmem [shape: f32[16,128], index: 1, kind: input, shape index: {}]
  %s2 = inlined_call_operand.vmem [shape: f32[16,128], index: 2, kind: output, shape index: {}]
  %s3 = sld [smem:[#allocation0]]
  $region18: #{attention1_nei.3} parent=0
    _
  %s5 = ssub.s32 1, %s3
  %s6 = scalar_select 0, %s5, %s3
  // Predicated region
  $region2: #{attention1_nei.3} parent=0 // pred_check
    _
  $region3: #{attention1_nei.3} parent=0 // pred_check_branch
    %8 = sbr.rel (0) target = $region5
  $region4: #{attention1_nei.3} parent=0 // pred_region
    _
  $region5: #{attention1_nei.3} parent=0 // pred_fallthru
    _
  // Predicated region
  $region6: #{attention1_nei.3} parent=0 // pred_check
    _
  $region7: #{attention1_nei.3} parent=0 // pred_check_branch
    %10 = sbr.rel (0) target = $region9
  $region8: #{attention1_nei.3} parent=0 // pred_region
    _
  $region9: #{attention1_nei.3} parent=0 // pred_fallthru
    _
  %v11 = vld [vmem:[%s0] sm:$0x1]
  %v12 = vld [vmem:[%s1] sm:$0xff]
  %v13 = vld [vmem:[%s1 + $0x8] sm:$0xff]
  %v15 = vperm.slane %v11, 0
  %v17 = vmul.f32 %v12, %v15
  %v18 = vmul.f32 %v13, %v15
  %19 = vst [vmem:[%s2] sm:$0xff] %v17
  %20 = vst [vmem:[%s2 + $0x8] sm:$0xff] %v18
  // Predicated region
  $region10: #{attention1_nei.3} parent=0 // pred_check
    _
  $region11: #{attention1_nei.3} parent=0 // pred_check_branch
    %22 = sbr.rel (0) target = $region13
  $region12: #{attention1_nei.3} parent=0 // pred_region
    _
  $region13: #{attention1_nei.3} parent=0 // pred_fallthru
    _
  // Predicated region
  $region14: #{attention1_nei.3} parent=0 // pred_check
    _
  $region15: #{attention1_nei.3} parent=0 // pred_check_branch
    %24 = sbr.rel (0) target = $region17
  $region16: #{attention1_nei.3} parent=0 // pred_region
    _
  $region17: #{attention1_nei.3} parent=0 // pred_fallthru
    _

// kernel: attention1_nei.2
$region0: #{attention1_nei.2}
  #allocation0 [shape = 'u32[]', space=smem, size = 0x4, offset = 0x4, fixed_abs, tag = 'smem constant byte address 0x4 - core index']
  #allocation1 [shape = 'u32[72,128]{1,0:T(1,128)}', space=vmem, size = 0x9000, scoped, tag = 'internal scratch']
  #allocation2 [shape = 'f32[1,32]{1,0:T(1,128)}', space=vmem, size = 0x200, scoped, tag = 'scratch operand']
  %s0 = inlined_call_operand.vmem [shape: f32[64,32], index: 0, kind: input, shape index: {}]
  %s1 = inlined_call_operand.vmem [shape: f32[32,8], index: 1, kind: input, shape index: {}]
  %s2 = inlined_call_operand.vmem [shape: f32[1,8], index: 2, kind: input, shape index: {}]
  %s3 = inlined_call_operand.vmem [shape: f32[8,32], index: 3, kind: input, shape index: {}]
  %s4 = inlined_call_operand.vmem [shape: f32[1,32], index: 4, kind: input, shape index: {}]
  %s5 = inlined_call_operand.vmem [shape: f32[1,32], index: 5, kind: output, shape index: {}]
  %s6 = sld [smem:[#allocation0]]
  $region38: #{attention1_nei.2} parent=0
    _
  %s8 = ssub.s32 1, %s6
  %s9 = scalar_select 0, %s8, %s6
  // Predicated region
  $region2: #{attention1_nei.2} parent=0 // pred_check
    _
  $region3: #{attention1_nei.2} parent=0 // pred_check_branch
    %11 = sbr.rel (0) target = $region5
  $region4: #{attention1_nei.2} parent=0 // pred_region
    _
  $region5: #{attention1_nei.2} parent=0 // pred_fallthru
    _
  // Predicated region
  $region6: #{attention1_nei.2} parent=0 // pred_check
    _
  $region7: #{attention1_nei.2} parent=0 // pred_check_branch
    %13 = sbr.rel (0) target = $region9
  $region8: #{attention1_nei.2} parent=0 // pred_region
    _
  $region9: #{attention1_nei.2} parent=0 // pred_fallthru
    _
  // Predicated region
  $region10: #{attention1_nei.2} parent=0 // pred_check
    _
  $region11: #{attention1_nei.2} parent=0 // pred_check_branch
    %15 = sbr.rel (0) target = $region13
  $region12: #{attention1_nei.2} parent=0 // pred_region
    _
  $region13: #{attention1_nei.2} parent=0 // pred_fallthru
    _
  // Predicated region
  $region14: #{attention1_nei.2} parent=0 // pred_check
    _
  $region15: #{attention1_nei.2} parent=0 // pred_check_branch
    %17 = sbr.rel (0) target = $region17
  $region16: #{attention1_nei.2} parent=0 // pred_region
    _
  $region17: #{attention1_nei.2} parent=0 // pred_fallthru
    _
  // Predicated region
  $region18: #{attention1_nei.2} parent=0 // pred_check
    _
  $region19: #{attention1_nei.2} parent=0 // pred_check_branch
    %19 = sbr.rel (0) target = $region21
  $region20: #{attention1_nei.2} parent=0 // pred_region
    _
  $region21: #{attention1_nei.2} parent=0 // pred_fallthru
    _
  %p20 = scmp.eq.s32.totalorder 0, 0
  // Predicated region
  $region22: #{attention1_nei.2} parent=0 // pred_check
    %p21 = pneg %p20
  $region23: #{attention1_nei.2} parent=0 // pred_check_branch
    %23 = sbr.rel (%p21) target = $region25
  $region24: #{attention1_nei.2} parent=0 // pred_region
    %vm24 = vcmask 253952
    %25 = vst.msk [vmem:[#allocation2] sm:$0x1] %vm24, 0.0
  $region25: #{attention1_nei.2} parent=0 // pred_fallthru
    _
  %v26 = vld [vmem:[%s0] sm:$0xff]
  %v27 = vld [vmem:[%s0 + $0x8] sm:$0xff]
  %v28 = vld [vmem:[%s0 + $0x10] sm:$0xff]
  %v29 = vld [vmem:[%s0 + $0x18] sm:$0xff]
  %v30 = vld [vmem:[%s0 + $0x20] sm:$0xff]
  %v31 = vld [vmem:[%s0 + $0x28] sm:$0xff]
  %v32 = vld [vmem:[%s0 + $0x30] sm:$0xff]
  %v33 = vld [vmem:[%s0 + $0x38] sm:$0xff]
  %v34 = vld [vmem:[#allocation2] sm:$0x1]
  %vm35 = vcmask 261120
  %v36 = vsel %vm35, %v26, 0.0
  %v37 = vsel %vm35, %v27, 0.0
  %v38 = vadd.f32 %v36, %v37
  %v39 = vsel %vm35, %v28, 0.0
  %v40 = vadd.f32 %v38, %v39
  %v41 = vsel %vm35, %v29, 0.0
  %v42 = vadd.f32 %v40, %v41
  %v43 = vsel %vm35, %v30, 0.0
  %v44 = vadd.f32 %v42, %v43
  %v45 = vsel %vm35, %v31, 0.0
  %v46 = vadd.f32 %v44, %v45
  %v47 = vsel %vm35, %v32, 0.0
  %v48 = vadd.f32 %v46, %v47
  %v49 = vsel %vm35, %v33, 0.0
  %v50 = vadd.f32 %v48, %v49
  %v51 = vrot.slane %v50, 4
  %v52 = vadd.f32 %v50, %v51
  %v53 = vrot.slane %v52, 2
  %v54 = vadd.f32 %v52, %v53
  %v55 = vrot.slane %v54, 1
  %v56 = vadd.f32 %v54, %v55
  %v57 = vadd.f32 %v34, %v56
  %vm58 = vcmask 253952
  %59 = vst.msk [vmem:[#allocation2] sm:$0x1] %vm58, %v57
  // Predicated region
  $region26: #{attention1_nei.2} parent=0 // pred_check
    %p60 = pneg %p20
  $region27: #{attention1_nei.2} parent=0 // pred_check_branch
    %62 = sbr.rel (%p60) target = $region29
  $region28: #{attention1_nei.2} parent=0 // pred_region
    %v63 = vld [vmem:[#allocation2] sm:$0x1]
    %v64 = vmul.f32 %v63, 0.015625
    %v65 = vld [vmem:[%s1] sm:$0xff]
    %v66 = vld [vmem:[%s1 + $0x8] sm:$0xff]
    %v67 = vld [vmem:[%s1 + $0x10] sm:$0xff]
    %v68 = vld [vmem:[%s1 + $0x18] sm:$0xff]
    %v69 = vld [vmem:[%s2] sm:$0x1]
    %v71 = vsel %vm35, %v64, 0
    %73 = vmatpush.msra.mxu0 0.0
    %74 = vmatpush.msra.mxu0 0.0
    %75 = vmatpush.msra.mxu0 0.0
    %76 = vmatpush.msra.mxu0 0.0
    %77 = vmatpush.msra.mxu0 0.0
    %78 = vmatpush.msra.mxu0 0.0
    %79 = vmatpush.msra.mxu0 0.0
    %80 = vmatpush.msra.mxu0 0.0
    %81 = vmatpush.msra.mxu0 0.0
    %82 = vmatpush.msra.mxu0 0.0
    %83 = vmatpush.msra.mxu0 0.0
    %84 = vmatpush.msra.mxu0 0.0
    %85 = vmatpush.msra.mxu0 %v68
    %86 = vmatpush.msra.mxu0 %v67
    %87 = vmatpush.msra.mxu0 %v66
    %88 = vmatpush.msra.mxu0 %v65
    %89 = vmatmul.f32.gmra.mxu0 %v71
    %v90 = vpop.f32.mrf.mxu0
    %v91 = vadd.f32 %v69, %v90
    %92 = vdwg.mxu0
    %v93 = vmax.f32 %v91, 0.0
    %v94 = vld [vmem:[%s3] sm:$0xff]
    %v95 = vld [vmem:[%s4] sm:$0x1]
    %vm96 = vcmask 64512
    %v98 = vsel %vm96, %v93, 0
    %100 = vmatpush.msra.mxu0 0.0
    %101 = vmatpush.msra.mxu0 0.0
    %102 = vmatpush.msra.mxu0 0.0
    %103 = vmatpush.msra.mxu0 0.0
    %104 = vmatpush.msra.mxu0 0.0
    %105 = vmatpush.msra.mxu0 0.0
    %106 = vmatpush.msra.mxu0 0.0
    %107 = vmatpush.msra.mxu0 0.0
    %108 = vmatpush.msra.mxu0 0.0
    %109 = vmatpush.msra.mxu0 0.0
    %110 = vmatpush.msra.mxu0 0.0
    %111 = vmatpush.msra.mxu0 0.0
    %112 = vmatpush.msra.mxu0 0.0
    %113 = vmatpush.msra.mxu0 0.0
    %114 = vmatpush.msra.mxu0 0.0
    %115 = vmatpush.msra.mxu0 %v94
    %116 = vmatmul.f32.gmra.mxu0 %v98
    %v117 = vpop.f32.mrf.mxu0
    %v118 = vadd.f32 %v95, %v117
    %119 = vdwg.mxu0
    %v120 = vxor.u32 %v118, 2147483648
    %v121 = vmul.f32 %v120, 1.442695
    %v122 = vpow.pop %v121
    %v123 = vadd.f32 %v122, 1.0
    %v124 = vrcp.pop %v123
    %v125 = vmul.f32 %v123, %v124
    %v126 = vsub.f32 1.0, %v125
    %v127 = vmul.f32 %v124, %v126
    %v128 = vadd.f32 %v124, %v127
    %vm129 = vweird.f32 %v123
    %vm130 = vweird.f32 %v124
    %vm131 = vmor %vm129, %vm130
    %v132 = vsel %vm131, %v124, %v128
    %v133 = vand.u32 2147483647, %v123
    %vm134 = vcmp.eq.f32.partialorder %v133, 8.507059e+37
    %v135 = vand.u32 %v123, 2147483648
    %v136 = vor.u32 1.1754944e-38, %v135
    %v137 = vsel %vm134, %v136, %v132
    %v138 = vmul.f32 1.0, %v137
    %139 = vst.msk [vmem:[%s5] sm:$0x1] %vm58, %v138
  $region29: #{attention1_nei.2} parent=0 // pred_fallthru
    _
  // Predicated region
  $region30: #{attention1_nei.2} parent=0 // pred_check
    _
  $region31: #{attention1_nei.2} parent=0 // pred_check_branch
    %141 = sbr.rel (0) target = $region33
  $region32: #{attention1_nei.2} parent=0 // pred_region
    _
  $region33: #{attention1_nei.2} parent=0 // pred_fallthru
    _
  // Predicated region
  $region34: #{attention1_nei.2} parent=0 // pred_check
    _
  $region35: #{attention1_nei.2} parent=0 // pred_check_branch
    %143 = sbr.rel (0) target = $region37
  $region36: #{attention1_nei.2} parent=0 // pred_region
    _
  $region37: #{attention1_nei.2} parent=0 // pred_fallthru
    _

</llo_original>
